<compile_context>
chip_gen: v7x
topology: tpu7x:2x2x1
jax: 0.10.0
libtpu: 0.0.40
codegen_flags: <defaults>
</compile_context>

<pallas_src>
import jax
import jax.numpy as jnp
from jax.experimental import pallas as pl
from jax.experimental.pallas import tpu as pltpu


# ----------------------------------------------------------------------------
# Kernel
# ----------------------------------------------------------------------------
def two_stage_q_kernel(x_ref, wf_ref, bf_ref, wh_ref, bh_ref, wo_ref, bo_ref,
                       q_ref):
    """Fused two-stage action-value forward pass.

    x_ref  : [TB, IN]  f32 (natural stream) or bf16 (padded path)
    wf_ref : [F, IN]   bf16  -- state_action_feature weight (transposed)
    bf_ref : [F, 1]    f32
    wh_ref : [H, F]    bf16  -- predictor hidden weight (transposed)
    bh_ref : [H, 1]    f32
    wo_ref : [H, 1]    f32   -- predictor output weight (column)
    bo_ref : [1, 1]    f32   -- SMEM scalar
    q_ref  : [1, TB]   f32   -- lane-dense Q slab for this tile
    """
    x = x_ref[...].astype(jnp.bfloat16)                     # [TB, IN]

    # stage 1: feat = relu(Wf @ x^T + bf), computed feature-major [F, TB].
    # NT contraction (contract last dims of both operands) -> no explicit
    # transpose materialized; same pattern the MXU runs for q @ k^T.
    feat = jax.lax.dot_general(
        wf_ref[...], x, (((1,), (1,)), ((), ())),
        preferred_element_type=jnp.float32)                  # [F, TB]
    feat = jnp.maximum(feat + bf_ref[...], 0.0)

    # stage 2a: h = relu(Wh @ feat + bh), still feature-major.
    h = jnp.dot(wh_ref[...], feat.astype(jnp.bfloat16),
                preferred_element_type=jnp.float32)          # [H, TB]
    h = jnp.maximum(h + bh_ref[...], 0.0)

    # stage 2b: scalar head as VPU multiply + sublane (XLU) reduction.
    # Keeps the MXU/vex slot free and the (1, TB) output lane-dense.
    q = jnp.sum(h * wo_ref[...], axis=0, keepdims=True) + bo_ref[0, 0]
    q_ref[...] = q.astype(q_ref.dtype)


# ----------------------------------------------------------------------------
# Tiling policy
# ----------------------------------------------------------------------------
def _choose_batch_tile(batch, in_dim, cap=16384, target_blocks=8,
                       split_floor=1024):
    """Pick the batch tile (multiple of 128).

    - Big enough to amortize the ~0.35 us per-grid-step overhead (cap 16 K).
    - A single streamed x buffer stays <= ~4 MiB (v5e/v7x VMEM headroom).
    - At large B, keep >= `target_blocks` grid steps so the "parallel" batch
      axis can shard across v7x's two TensorCores.
    - Prefer a tile that divides the (128-rounded) batch exactly: zero padded
      rows -> the wrapper can stream x with no pad/cast pass at all.
    """
    cap = min(cap, max(128, ((4 << 20) // max(1, in_dim * 4)) // 128 * 128))
    b128 = 128 * pl.cdiv(batch, 128)
    m = b128 // 128
    n_min = pl.cdiv(b128, cap)                      # VMEM / tile-cap constraint
    if b128 >= target_blocks * split_floor:         # only split once pieces are
        n_min = max(n_min, target_blocks)           # still >= split_floor rows
    n_min = max(n_min, 1)
    for nblk in range(n_min, min(m, n_min + 256) + 1):
        if m % nblk == 0 and 128 * (m // nblk) <= cap:
            return 128 * (m // nblk)                # exact divisor -> no waste
    return min(cap, 128 * pl.cdiv(pl.cdiv(b128, n_min), 128))


# ----------------------------------------------------------------------------
# Wrappers
# ----------------------------------------------------------------------------
def _xla_batch_forward(x, params):
    """Plain-XLA path with the same bf16-operand / f32-accumulate numerics as
    the kernel.  Used for tiny batches (single forward / stop_forward) where
    the pallas_call launch + pipeline prologue would dominate."""
    wf, bf, wh, bh, wo, bo = params
    xb = x.astype(jnp.bfloat16)
    feat = jnp.maximum(
        jnp.dot(xb, wf.astype(jnp.bfloat16),
                preferred_element_type=jnp.float32) + bf.reshape(1, -1), 0.0)
    h = jnp.maximum(
        jnp.dot(feat.astype(jnp.bfloat16), wh.astype(jnp.bfloat16),
                preferred_element_type=jnp.float32) + bh.reshape(1, -1), 0.0)
    return (h @ wo.reshape(-1, 1).astype(jnp.float32)
            + bo.reshape(1, 1)).reshape(-1)


def two_stage_batch_forward(x, params, *, tb=None, buffer_count=3,
                            min_pallas_batch=256):
    """Equivalent of TwoStageActionValueFunction.batch_forward: returns Q[B]."""
    wf, bf, wh, bh, wo, bo = params
    B, in_dim = x.shape
    feature_dim = wf.shape[1]
    hidden_dim = wh.shape[1]

    # Small-batch fallback (forward / stop_forward style calls).
    if B < min_pallas_batch:
        return _xla_batch_forward(x, params)

    if tb is None:
        tb = _choose_batch_tile(B, in_dim)
    assert tb % 128 == 0
    n_blocks = pl.cdiv(B, tb)
    b_pad = tb * n_blocks

    # Streamed activations: if the batch tiles exactly, stream x in its natural
    # [B, IN] f32 layout (no wrapper pass over x).  Otherwise a padded copy is
    # unavoidable, so fold the bf16 cast into that same single pass.
    if b_pad == B:
        x_stream = x
    else:
        x_stream = jnp.pad(x, ((0, b_pad - B), (0, 0))).astype(jnp.bfloat16)

    # Tiny weights/biases: constant-index blocks -> fetched once, VMEM-resident.
    wf_t = wf.T.astype(jnp.bfloat16)                        # [F, IN]
    wh_t = wh.T.astype(jnp.bfloat16)                        # [H, F]
    bf_c = bf.reshape(feature_dim, 1).astype(jnp.float32)
    bh_c = bh.reshape(hidden_dim, 1).astype(jnp.float32)
    wo_c = wo.reshape(hidden_dim, 1).astype(jnp.float32)
    bo_s = bo.reshape(1, 1).astype(jnp.float32)

    # x is the only streamed operand: deepen its pipeline when supported.
    x_spec = pl.BlockSpec((tb, in_dim), lambda i: (i, 0))
    if buffer_count is not None and hasattr(pl, "Buffered"):
        try:
            x_spec = pl.BlockSpec((tb, in_dim), lambda i: (i, 0),
                                  pipeline_mode=pl.Buffered(buffer_count))
        except TypeError:
            pass  # older BlockSpec without pipeline_mode: default double-buffer

    n_buf = buffer_count if buffer_count is not None else 2
    x_item = x_stream.dtype.itemsize
    vmem_need = (n_buf * tb * in_dim * x_item                 # streamed x tiles
                 + 2 * tb * (feature_dim + hidden_dim) * 4    # stage activations
                 + 4 * tb * 4                                 # q output blocks
                 + (feature_dim * in_dim + hidden_dim * feature_dim) * 2
                 + (2 * feature_dim + 3 * hidden_dim) * 4
                 + (2 << 20))                                 # compiler scratch
    # v7x has 64 MiB physical VMEM (32 MiB scoped default); stay well inside.
    vmem_limit = int(min(max(vmem_need, 32 << 20), 56 << 20))

    flops = 2 * B * (in_dim * feature_dim + feature_dim * hidden_dim + hidden_dim)
    bytes_accessed = int(b_pad * in_dim * x_item + b_pad * 4
                         + wf_t.size * 2 + wh_t.size * 2
                         + (bf_c.size + bh_c.size + wo_c.size + 1) * 4)

    q_pad = pl.pallas_call(
        two_stage_q_kernel,
        out_shape=jax.ShapeDtypeStruct((1, b_pad), jnp.float32),
        grid=(n_blocks,),
        in_specs=[
            x_spec,
            pl.BlockSpec((feature_dim, in_dim), lambda i: (0, 0)),
            pl.BlockSpec((feature_dim, 1), lambda i: (0, 0)),
            pl.BlockSpec((hidden_dim, feature_dim), lambda i: (0, 0)),
            pl.BlockSpec((hidden_dim, 1), lambda i: (0, 0)),
            pl.BlockSpec((hidden_dim, 1), lambda i: (0, 0)),
            pl.BlockSpec(memory_space=pltpu.MemorySpace.SMEM),
        ],
        # Lane-dense (1, tb) output block: no masked vst.msk partial stores.
        out_specs=pl.BlockSpec((1, tb), lambda i: (0, i)),
        compiler_params=pltpu.CompilerParams(
            dimension_semantics=("parallel",),
            vmem_limit_bytes=vmem_limit),
        cost_estimate=pl.CostEstimate(
            flops=flops, transcendentals=0, bytes_accessed=bytes_accessed),
    )(x_stream, wf_t, bf_c, wh_t, bh_c, wo_c, bo_s)

    # batch_forward(...).reshape(-1); padded rows sliced off.
    return q_pad[0, :B]


def two_stage_forward(observation, action, params):
    """Equivalent of .forward(observation, action, action_space): scalar Q."""
    x = jnp.concatenate([observation, action])[None, :]
    return two_stage_batch_forward(x, params)[0]


def two_stage_stop_forward(observation, params, act_dim):
    """Equivalent of .stop_forward(observation): Q(s, stop)."""
    # TODO(synk): the real state_action_feature.stop_forward may encode the stop
    # action differently; mirror it here once that sub-module is specified.
    x = jnp.concatenate([observation,
                         jnp.zeros((act_dim,), observation.dtype)])[None, :]
    return two_stage_batch_forward(x, params)[0]


# ----------------------------------------------------------------------------
# Parameters & references
# ----------------------------------------------------------------------------
def make_params(key, in_dim, feature_dim, hidden_dim):
    """Deterministic synthetic parameters (no checkpoint loading)."""
    k = jax.random.split(key, 6)
    scale = 0.1
    wf = scale * jax.random.normal(k[0], (in_dim, feature_dim), jnp.float32)
    bf = scale * jax.random.normal(k[1], (1, feature_dim), jnp.float32)
    wh = scale * jax.random.normal(k[2], (feature_dim, hidden_dim), jnp.float32)
    bh = scale * jax.random.normal(k[3], (1, hidden_dim), jnp.float32)
    wo = scale * jax.random.normal(k[4], (hidden_dim, 1), jnp.float32)
    bo = scale * jax.random.normal(k[5], (1, 1), jnp.float32)
    return (wf, bf, wh, bh, wo, bo)


def reference_forward(x, params):
    """Pure-f32 reference (original module semantics)."""
    wf, bf, wh, bh, wo, bo = params
    feat = jnp.maximum(x @ wf + bf, 0.0)
    h = jnp.maximum(feat @ wh + bh, 0.0)
    return (h @ wo + bo).reshape(-1)


def reference_forward_bf16(x, params):
    """Reference emulating the kernel's bf16 operand rounding (f32 accumulate)."""
    wf, bf, wh, bh, wo, bo = params
    f32 = jnp.float32
    xb = x.astype(jnp.bfloat16).astype(f32)
    wfb = wf.astype(jnp.bfloat16).astype(f32)
    whb = wh.astype(jnp.bfloat16).astype(f32)
    feat = jnp.maximum(xb @ wfb + bf, 0.0)
    featb = feat.astype(jnp.bfloat16).astype(f32)
    h = jnp.maximum(featb @ whb + bh, 0.0)
    return (h @ wo + bo).reshape(-1)


# ----------------------------------------------------------------------------
# Self-test
# ----------------------------------------------------------------------------
if __name__ == "__main__":
    B = 8
    OBS_DIM = 20
    ACT_DIM = 12
    IN_DIM = OBS_DIM + ACT_DIM          # state_action_feature input dim
    FEATURE_DIM = 32                    # state_action_feature.out_dim == predictor.in_dim
    HIDDEN_DIM = 32                     # predictor hidden width

    key = jax.random.PRNGKey(0)
    k_obs, k_act, k_param, k_big = jax.random.split(key, 4)

    obs = jax.random.normal(k_obs, (B, OBS_DIM), jnp.float32)
    act = jax.random.normal(k_act, (B, ACT_DIM), jnp.float32)
    x_batch = jnp.concatenate([obs, act], axis=-1)                 # [B, IN]
    params = make_params(k_param, IN_DIM, FEATURE_DIM, HIDDEN_DIM)

    x_stop = jnp.concatenate([obs[0], jnp.zeros((ACT_DIM,), jnp.float32)])[None]
    x_all = jnp.concatenate([x_batch, x_batch[:1], x_stop], axis=0)  # [B+2, IN]

    def run_checks(buffer_count):
        # 1) batch_forward through the Pallas kernel (forced even at tiny B):
        #    single-block grid, padded bf16 streaming path.
        q_all = jax.block_until_ready(
            two_stage_batch_forward(x_all, params, min_pallas_batch=0,
                                    buffer_count=buffer_count))
        assert q_all.shape == (B + 2,)
        assert jnp.allclose(q_all, reference_forward_bf16(x_all, params),
                            atol=2e-3, rtol=2e-3)
        assert jnp.allclose(q_all, reference_forward(x_all, params),
                            atol=5e-2, rtol=5e-2)

        # 2) forward / stop_forward: tiny batches route to the plain-XLA
        #    fallback; results must agree with the fused kernel rows.
        q_single = two_stage_forward(obs[0], act[0], params)
        q_stop = two_stage_stop_forward(obs[0], params, ACT_DIM)
        assert jnp.allclose(q_single, q_all[B], atol=2e-3, rtol=2e-3)
        assert jnp.allclose(q_stop, q_all[B + 1], atol=2e-3, rtol=2e-3)

        # 3) multi-block grid, batch divisible by the tile: natural-layout f32
        #    streaming (no wrapper pad/transpose/cast pass over x).
        B2 = 2048
        x2 = jax.random.normal(k_big, (B2, IN_DIM), jnp.float32)
        q2 = jax.block_until_ready(
            two_stage_batch_forward(x2, params, tb=512, min_pallas_batch=0,
                                    buffer_count=buffer_count))
        assert q2.shape == (B2,)
        assert jnp.allclose(q2, reference_forward_bf16(x2, params),
                            atol=2e-3, rtol=2e-3)

        # 4) multi-block grid with a ragged batch: remainder handled by the
        #    padded bf16 path (padded rows sliced off).
        B3 = 1333
        x3 = jax.random.normal(jax.random.PRNGKey(1), (B3, IN_DIM), jnp.float32)
        q3 = jax.block_until_ready(
            two_stage_batch_forward(x3, params, tb=256, min_pallas_batch=0,
                                    buffer_count=buffer_count))
        assert q3.shape == (B3,)
        assert jnp.allclose(q3, reference_forward_bf16(x3, params),
                            atol=2e-3, rtol=2e-3)

    try:
        run_checks(3)          # triple-buffered x stream (pl.Buffered(3))
    except Exception:          # pipeline_mode / Buffered unsupported here
        run_checks(None)       # fall back to default double-buffering
    print("KERNEL_OK")
</pallas_src>

<mosaic_0001>
module attributes {stable_mosaic.version = 11 : i64} {
  func.func @two_stage_q_kernel(%arg0: i32, %arg1: memref<128x32xbf16, #tpu.memory_space<vmem>>, %arg2: memref<32x32xbf16, #tpu.memory_space<vmem>>, %arg3: memref<32x1xf32, #tpu.memory_space<vmem>>, %arg4: memref<32x32xbf16, #tpu.memory_space<vmem>>, %arg5: memref<32x1xf32, #tpu.memory_space<vmem>>, %arg6: memref<32x1xf32, #tpu.memory_space<vmem>>, %arg7: memref<1x1xf32, #tpu.memory_space<smem>>, %arg8: memref<1x128xf32, #tpu.memory_space<vmem>>) attributes {dimension_semantics = [#tpu.dimension_semantics<parallel>], iteration_bounds = array<i64: 1>, scalar_prefetch = 0 : i64, scratch_operands = 0 : i64, tpu.core_type = #tpu.core_type<tc>, window_params = [{transform_indices = @transform_0, window_bounds = array<i64: 128, 32>}, {pipeline_mode = #tpu.pipeline_mode<synchronous>, transform_indices = @transform_1, window_bounds = array<i64: 32, 32>}, {pipeline_mode = #tpu.pipeline_mode<synchronous>, transform_indices = @transform_2, window_bounds = array<i64: 32, 1>}, {pipeline_mode = #tpu.pipeline_mode<synchronous>, transform_indices = @transform_3, window_bounds = array<i64: 32, 32>}, {pipeline_mode = #tpu.pipeline_mode<synchronous>, transform_indices = @transform_4, window_bounds = array<i64: 32, 1>}, {pipeline_mode = #tpu.pipeline_mode<synchronous>, transform_indices = @transform_5, window_bounds = array<i64: 32, 1>}, {transform_indices = @transform_6, window_bounds = array<i64: 1, 1>}, {transform_indices = @transform_7, window_bounds = array<i64: 1, 128>}]} {
    %c0 = arith.constant 0 : index
    %c0_0 = arith.constant 0 : index
    %0 = vector.load %arg1[%c0, %c0_0] : memref<128x32xbf16, #tpu.memory_space<vmem>>, vector<128x32xbf16>
    %c0_1 = arith.constant 0 : index
    %c0_2 = arith.constant 0 : index
    %1 = vector.load %arg2[%c0_1, %c0_2] : memref<32x32xbf16, #tpu.memory_space<vmem>>, vector<32x32xbf16>
    %cst = arith.constant dense<0.000000e+00> : vector<32x128xf32>
    %2 = tpu.matmul %1, %0, %cst {dimension_numbers = #tpu.dot_dimension_numbers<[1], [1], [0], [0], [0, 0, 1, 0], [], []>} : vector<32x32xbf16>, vector<128x32xbf16>, vector<32x128xf32> -> vector<32x128xf32>
    %c0_3 = arith.constant 0 : index
    %c0_4 = arith.constant 0 : index
    %3 = vector.load %arg3[%c0_3, %c0_4] : memref<32x1xf32, #tpu.memory_space<vmem>>, vector<32x1xf32>
    %4 = vector.broadcast %3 : vector<32x1xf32> to vector<32x128xf32>
    %5 = arith.addf %2, %4 : vector<32x128xf32>
    %cst_5 = arith.constant 0.000000e+00 : f32
    %6 = vector.broadcast %cst_5 : f32 to vector<32x128xf32>
    %7 = arith.maximumf %5, %6 : vector<32x128xf32>
    %c0_6 = arith.constant 0 : index
    %c0_7 = arith.constant 0 : index
    %8 = vector.load %arg4[%c0_6, %c0_7] : memref<32x32xbf16, #tpu.memory_space<vmem>>, vector<32x32xbf16>
    %9 = arith.truncf %7 : vector<32x128xf32> to vector<32x128xbf16>
    %cst_8 = arith.constant dense<0.000000e+00> : vector<32x128xf32>
    %10 = tpu.matmul %8, %9, %cst_8 {dimension_numbers = #tpu.dot_dimension_numbers<[1], [0], [0], [1], [0, 0, 1, 1], [], []>} : vector<32x32xbf16>, vector<32x128xbf16>, vector<32x128xf32> -> vector<32x128xf32>
    %c0_9 = arith.constant 0 : index
    %c0_10 = arith.constant 0 : index
    %11 = vector.load %arg5[%c0_9, %c0_10] : memref<32x1xf32, #tpu.memory_space<vmem>>, vector<32x1xf32>
    %12 = vector.broadcast %11 : vector<32x1xf32> to vector<32x128xf32>
    %13 = arith.addf %10, %12 : vector<32x128xf32>
    %cst_11 = arith.constant 0.000000e+00 : f32
    %14 = vector.broadcast %cst_11 : f32 to vector<32x128xf32>
    %15 = arith.maximumf %13, %14 : vector<32x128xf32>
    %c0_12 = arith.constant 0 : index
    %c0_13 = arith.constant 0 : index
    %16 = vector.load %arg6[%c0_12, %c0_13] : memref<32x1xf32, #tpu.memory_space<vmem>>, vector<32x1xf32>
    %17 = vector.broadcast %16 : vector<32x1xf32> to vector<32x128xf32>
    %18 = arith.mulf %15, %17 : vector<32x128xf32>
    %cst_14 = arith.constant dense<0.000000e+00> : vector<128xf32>
    %19 = vector.multi_reduction <add>, %18, %cst_14 [0] : vector<32x128xf32> to vector<128xf32>
    %20 = vector.shape_cast %19 : vector<128xf32> to vector<1x128xf32>
    %c0_15 = arith.constant 0 : index
    %c0_16 = arith.constant 0 : index
    %21 = memref.load %arg7[%c0_15, %c0_16] : memref<1x1xf32, #tpu.memory_space<smem>>
    %22 = vector.broadcast %21 : f32 to vector<1x128xf32>
    %23 = arith.addf %20, %22 : vector<1x128xf32>
    %c0_17 = arith.constant 0 : index
    %c0_18 = arith.constant 0 : index
    %24 = vector.load %arg8[%c0_17, %c0_18] : memref<1x128xf32, #tpu.memory_space<vmem>>, vector<1x128xf32>
    tpu.vector_store %arg8[%c0_17, %c0_18], %23 {strides = array<i32>} : memref<1x128xf32, #tpu.memory_space<vmem>>, vector<1x128xf32>,
    return
  }
  func.func @transform_0(%arg0: i32) -> (i32, i32) {
    %c0_i32 = arith.constant 0 : i32
    %c0_i32_0 = arith.constant 0 : i32
    return %arg0, %c0_i32 : i32, i32
  }
  func.func @transform_1(%arg0: i32) -> (i32, i32) {
    %c0_i32 = arith.constant 0 : i32
    %c0_i32_0 = arith.constant 0 : i32
    %c0_i32_1 = arith.constant 0 : i32
    return %c0_i32, %c0_i32_0 : i32, i32
  }
  func.func @transform_2(%arg0: i32) -> (i32, i32) {
    %c0_i32 = arith.constant 0 : i32
    %c0_i32_0 = arith.constant 0 : i32
    %c0_i32_1 = arith.constant 0 : i32
    return %c0_i32, %c0_i32_0 : i32, i32
  }
  func.func @transform_3(%arg0: i32) -> (i32, i32) {
    %c0_i32 = arith.constant 0 : i32
    %c0_i32_0 = arith.constant 0 : i32
    %c0_i32_1 = arith.constant 0 : i32
    return %c0_i32, %c0_i32_0 : i32, i32
  }
  func.func @transform_4(%arg0: i32) -> (i32, i32) {
    %c0_i32 = arith.constant 0 : i32
    %c0_i32_0 = arith.constant 0 : i32
    %c0_i32_1 = arith.constant 0 : i32
    return %c0_i32, %c0_i32_0 : i32, i32
  }
  func.func @transform_5(%arg0: i32) -> (i32, i32) {
    %c0_i32 = arith.constant 0 : i32
    %c0_i32_0 = arith.constant 0 : i32
    %c0_i32_1 = arith.constant 0 : i32
    return %c0_i32, %c0_i32_0 : i32, i32
  }
  func.func @transform_6(%arg0: i32) -> (i32, i32) {
    %c0_i32 = arith.constant 0 : i32
    %c0_i32_0 = arith.constant 0 : i32
    %c0_i32_1 = arith.constant 0 : i32
    return %c0_i32, %c0_i32_0 : i32, i32
  }
  func.func @transform_7(%arg0: i32) -> (i32, i32) {
    %c0_i32 = arith.constant 0 : i32
    %c0_i32_0 = arith.constant 0 : i32
    return %c0_i32, %arg0 : i32, i32
  }
}

</mosaic_0001>

<llo_original>
// kernel: tpu_custom_call.1
$region0: #{tpu_custom_call.1}
  #allocation0 [shape = 'u32[]', space=smem, size = 0x4, offset = 0x4, fixed_abs, tag = 'smem constant byte address 0x4 - core index']
  #allocation1 [shape = 'u32[144,128]{1,0:T(1,128)}', space=vmem, size = 0x12000, scoped, tag = 'internal scratch']
  #allocation2 [shape = 'f32[1,1]{1,0:T(1,128)S(6)}', space=smem, size = 0x200, scoped, tag = 'scoped memory for tpu_custom_call.1']
  %s0 = inlined_call_operand.vmem [shape: bf16[128,32], index: 0, kind: input, shape index: {}]
  %s1 = inlined_call_operand.vmem [shape: bf16[32,32], index: 1, kind: input, shape index: {}]
  %s2 = inlined_call_operand.vmem [shape: f32[32,1], index: 2, kind: input, shape index: {}]
  %s3 = inlined_call_operand.vmem [shape: bf16[32,32], index: 3, kind: input, shape index: {}]
  %s4 = inlined_call_operand.vmem [shape: f32[32,1], index: 4, kind: input, shape index: {}]
  %s5 = inlined_call_operand.vmem [shape: f32[32,1], index: 5, kind: input, shape index: {}]
  %s6 = inlined_call_operand.<no memory space> [shape: f32[1,1], index: 6, kind: input, shape index: {}]
  %s7 = inlined_call_operand.hbm [shape: f32[1,128], index: 7, kind: output, shape index: {}]
  %s8 = sld [smem:[#allocation0]]
  $region38: #{tpu_custom_call.1} parent=0
    _
  %s10 = ssub.s32 1, %s8
  %s11 = scalar_select 0, %s10, %s8
  %12 = sst [smem:[#allocation2]] %s6
  $region1: #{tpu_custom_call.1} parent=0
    #allocation3 [shape = 'u8[512]{0}', space=vmem, size = 0x400, scoped, tag = 'output window, operand 0, single buffered']
    #allocation4 [shape = 's32[1]{0}', space=sflag, size = 0x4, scoped, tag = 'scoped memory for tpu_custom_call.1']
    %13 = vsyncpa [#allocation4], 0
    // Predicated region
    $region2: #{tpu_custom_call.1} parent=1 // pred_check
      _
    $region3: #{tpu_custom_call.1} parent=1 // pred_check_branch
      %15 = sbr.rel (0) target = $region5
    $region4: #{tpu_custom_call.1} parent=1 // pred_region
      _
    $region5: #{tpu_custom_call.1} parent=1 // pred_fallthru
      _
    // Predicated region
    $region6: #{tpu_custom_call.1} parent=1 // pred_check
      _
    $region7: #{tpu_custom_call.1} parent=1 // pred_check_branch
      %17 = sbr.rel (0) target = $region9
    $region8: #{tpu_custom_call.1} parent=1 // pred_region
      _
    $region9: #{tpu_custom_call.1} parent=1 // pred_fallthru
      _
    // Predicated region
    $region10: #{tpu_custom_call.1} parent=1 // pred_check
      _
    $region11: #{tpu_custom_call.1} parent=1 // pred_check_branch
      %19 = sbr.rel (0) target = $region13
    $region12: #{tpu_custom_call.1} parent=1 // pred_region
      _
    $region13: #{tpu_custom_call.1} parent=1 // pred_fallthru
      _
    // Predicated region
    $region14: #{tpu_custom_call.1} parent=1 // pred_check
      _
    $region15: #{tpu_custom_call.1} parent=1 // pred_check_branch
      %21 = sbr.rel (0) target = $region17
    $region16: #{tpu_custom_call.1} parent=1 // pred_region
      _
    $region17: #{tpu_custom_call.1} parent=1 // pred_fallthru
      _
    // Predicated region
    $region18: #{tpu_custom_call.1} parent=1 // pred_check
      _
    $region19: #{tpu_custom_call.1} parent=1 // pred_check_branch
      %23 = sbr.rel (0) target = $region21
    $region20: #{tpu_custom_call.1} parent=1 // pred_region
      _
    $region21: #{tpu_custom_call.1} parent=1 // pred_fallthru
      _
    // Predicated region
    $region22: #{tpu_custom_call.1} parent=1 // pred_check
      _
    $region23: #{tpu_custom_call.1} parent=1 // pred_check_branch
      %25 = sbr.rel (0) target = $region25
    $region24: #{tpu_custom_call.1} parent=1 // pred_region
      _
    $region25: #{tpu_custom_call.1} parent=1 // pred_fallthru
      _
    // Predicated region
    $region26: #{tpu_custom_call.1} parent=1 // pred_check
      _
    $region27: #{tpu_custom_call.1} parent=1 // pred_check_branch
      %27 = sbr.rel (0) target = $region29
    $region28: #{tpu_custom_call.1} parent=1 // pred_region
      _
    $region29: #{tpu_custom_call.1} parent=1 // pred_fallthru
      _
    %v29 = vld [vmem:[%s0] sm:$0xf]
    %v30 = vld [vmem:[%s0 + $0x4] sm:$0xf]
    %v31 = vld [vmem:[%s0 + $0x8] sm:$0xf]
    %v32 = vld [vmem:[%s0 + $0xc] sm:$0xf]
    %v33 = vld [vmem:[%s0 + $0x10] sm:$0xf]
    %v34 = vld [vmem:[%s0 + $0x14] sm:$0xf]
    %v35 = vld [vmem:[%s0 + $0x18] sm:$0xf]
    %v36 = vld [vmem:[%s0 + $0x1c] sm:$0xf]
    %v37 = vld [vmem:[%s0 + $0x20] sm:$0xf]
    %v38 = vld [vmem:[%s0 + $0x24] sm:$0xf]
    %v39 = vld [vmem:[%s0 + $0x28] sm:$0xf]
    %v40 = vld [vmem:[%s0 + $0x2c] sm:$0xf]
    %v41 = vld [vmem:[%s0 + $0x30] sm:$0xf]
    %v42 = vld [vmem:[%s0 + $0x34] sm:$0xf]
    %v43 = vld [vmem:[%s0 + $0x38] sm:$0xf]
    %v44 = vld [vmem:[%s0 + $0x3c] sm:$0xf]
    %v45 = vld [vmem:[%s1] sm:$0xf]
    %v46 = vld [vmem:[%s1 + $0x4] sm:$0xf]
    %v47 = vld [vmem:[%s1 + $0x8] sm:$0xf]
    %v48 = vld [vmem:[%s1 + $0xc] sm:$0xf]
    %v49 = vld [vmem:[%s2] sm:$0xff]
    %v50 = vld [vmem:[%s2 + $0x8] sm:$0xff]
    %v51 = vld [vmem:[%s2 + $0x10] sm:$0xff]
    %v52 = vld [vmem:[%s2 + $0x18] sm:$0xff]
    %54 = vset.pattern.permute.xlu0 0
    %55 = vperm.xlu0 %54, %v49
    %v56 = vpop.permute.xlu0 %55
    %59 = vset.pattern.permute.xlu0 0
    %60 = vperm.xlu0 %59, %v50
    %v61 = vpop.permute.xlu0 %60
    %64 = vset.pattern.permute.xlu0 0
    %65 = vperm.xlu0 %64, %v51
    %v66 = vpop.permute.xlu0 %65
    %69 = vset.pattern.permute.xlu0 0
    %70 = vperm.xlu0 %69, %v52
    %v71 = vpop.permute.xlu0 %70
    %v77 = vunpack.c.l.b16 %v45
    %v78 = vunpack.c.l.b16 %v46
    %v79 = vunpack.c.l.b16 %v47
    %v80 = vunpack.c.l.b16 %v48
    %v81 = vpack.c.b16 %v78, %v77
    %v82 = vpack.c.b16 %v80, %v79
    %v99 = vunpack.c.l.b16 %v29
    %v100 = vunpack.c.l.b16 %v30
    %v101 = vunpack.c.l.b16 %v31
    %v102 = vunpack.c.l.b16 %v32
    %v103 = vunpack.c.l.b16 %v33
    %v104 = vunpack.c.l.b16 %v34
    %v105 = vunpack.c.l.b16 %v35
    %v106 = vunpack.c.l.b16 %v36
    %v107 = vunpack.c.l.b16 %v37
    %v108 = vunpack.c.l.b16 %v38
    %v109 = vunpack.c.l.b16 %v39
    %v110 = vunpack.c.l.b16 %v40
    %v111 = vunpack.c.l.b16 %v41
    %v112 = vunpack.c.l.b16 %v42
    %v113 = vunpack.c.l.b16 %v43
    %v114 = vunpack.c.l.b16 %v44
    %v115 = vpack.c.b16 %v100, %v99
    %v116 = vpack.c.b16 %v102, %v101
    %v117 = vpack.c.b16 %v104, %v103
    %v118 = vpack.c.b16 %v106, %v105
    %v119 = vpack.c.b16 %v108, %v107
    %v120 = vpack.c.b16 %v110, %v109
    %v121 = vpack.c.b16 %v112, %v111
    %v122 = vpack.c.b16 %v114, %v113
    %vm123 = vcmask 261120
    %v125 = vsel %vm123, %v81, 0
    %v128 = vsel %vm123, %v82, 0
    %v131 = vsel %vm123, %v115, 0
    %v134 = vsel %vm123, %v116, 0
    %v137 = vsel %vm123, %v117, 0
    %v140 = vsel %vm123, %v118, 0
    %v143 = vsel %vm123, %v119, 0
    %v146 = vsel %vm123, %v120, 0
    %v149 = vsel %vm123, %v121, 0
    %v152 = vsel %vm123, %v122, 0
    %154 = vmatprep.subr.bf16.mxu0 0
    %155 = vmatpush1.bf16.xpose.msra.mxu0 %v131
    %156 = vmatprep.subr.bf16.mxu0 0
    %157 = vmatpush1.bf16.xpose.msra.mxu0 %v134
    %158 = vmatprep.subr.bf16.mxu0 0
    %159 = vmatpush1.bf16.xpose.msra.mxu0 %v137
    %160 = vmatprep.subr.bf16.mxu0 0
    %161 = vmatpush1.bf16.xpose.msra.mxu0 %v140
    %162 = vmatprep.subr.bf16.mxu0 0
    %163 = vmatpush1.bf16.xpose.msra.mxu0 %v143
    %164 = vmatprep.subr.bf16.mxu0 0
    %165 = vmatpush1.bf16.xpose.msra.mxu0 %v146
    %166 = vmatprep.subr.bf16.mxu0 0
    %167 = vmatpush1.bf16.xpose.msra.mxu0 %v149
    %168 = vmatprep.subr.bf16.mxu0 0
    %169 = vmatpush1.bf16.xpose.msra.mxu0 %v152
    %170 = vmatprep.subr.bf16.mxu0 0
    %171 = vmatpush1.bf16.xpose.msra.mxu0 0
    %172 = vmatprep.subr.bf16.mxu0 0
    %173 = vmatpush1.bf16.xpose.msra.mxu0 0
    %174 = vmatprep.subr.bf16.mxu0 0
    %175 = vmatpush1.bf16.xpose.msra.mxu0 0
    %176 = vmatprep.subr.bf16.mxu0 0
    %177 = vmatpush1.bf16.xpose.msra.mxu0 0
    %178 = vmatprep.subr.bf16.mxu0 0
    %179 = vmatpush1.bf16.xpose.msra.mxu0 0
    %180 = vmatprep.subr.bf16.mxu0 0
    %181 = vmatpush1.bf16.xpose.msra.mxu0 0
    %182 = vmatprep.subr.bf16.mxu0 0
    %183 = vmatpush1.bf16.xpose.msra.mxu0 0
    %184 = vmatprep.subr.bf16.mxu0 0
    %185 = vmatpush1.bf16.xpose.msra.mxu0 0
    %186 = vmatprep.mubr.bf16.mxu0 0
    %187 = vmatmul.mubr.bf16.gmra.mrb[0].mxu0 %v125
    %v188 = vpop.f32.mrb[0].mxu0
    %v189 = vadd.f32 %v56, %v188
    %v190 = vpop.f32.mrb[0].mxu0
    %v191 = vpop.f32.mrb[0].mxu0
    %v192 = vadd.f32 %v61, %v191
    %v193 = vpop.f32.mrb[0].mxu0
    %194 = vmatprep.mubr.bf16.mxu0 0
    %195 = vmatmul.mubr.bf16.gmra.mrb[0].mxu0 %v128
    %v196 = vpop.f32.mrb[0].mxu0
    %v197 = vadd.f32 %v66, %v196
    %v198 = vpop.f32.mrb[0].mxu0
    %v199 = vpop.f32.mrb[0].mxu0
    %v200 = vadd.f32 %v71, %v199
    %v201 = vpop.f32.mrb[0].mxu0
    %202 = vdwg.mxu0
    %v203 = vmax.f32 %v189, 0.0
    %v204 = vmax.f32 %v192, 0.0
    %v205 = vmax.f32 %v197, 0.0
    %v206 = vmax.f32 %v200, 0.0
    %v207 = vld [vmem:[%s3] sm:$0xf]
    %v208 = vld [vmem:[%s3 + $0x4] sm:$0xf]
    %v209 = vld [vmem:[%s3 + $0x8] sm:$0xf]
    %v210 = vld [vmem:[%s3 + $0xc] sm:$0xf]
    %v211 = vpack.c.bf16 %v204, %v203
    %v212 = vpack.c.bf16 %v206, %v205
    %v213 = vld [vmem:[%s4] sm:$0xff]
    %v214 = vld [vmem:[%s4 + $0x8] sm:$0xff]
    %v215 = vld [vmem:[%s4 + $0x10] sm:$0xff]
    %v216 = vld [vmem:[%s4 + $0x18] sm:$0xff]
    %218 = vset.pattern.permute.xlu0 0
    %219 = vperm.xlu0 %218, %v213
    %v220 = vpop.permute.xlu0 %219
    %223 = vset.pattern.permute.xlu0 0
    %224 = vperm.xlu0 %223, %v214
    %v225 = vpop.permute.xlu0 %224
    %228 = vset.pattern.permute.xlu0 0
    %229 = vperm.xlu0 %228, %v215
    %v230 = vpop.permute.xlu0 %229
    %233 = vset.pattern.permute.xlu0 0
    %234 = vperm.xlu0 %233, %v216
    %v235 = vpop.permute.xlu0 %234
    %v241 = vunpack.c.l.b16 %v207
    %v242 = vunpack.c.l.b16 %v208
    %v243 = vunpack.c.l.b16 %v209
    %v244 = vunpack.c.l.b16 %v210
    %v245 = vpack.c.b16 %v242, %v241
    %v246 = vpack.c.b16 %v244, %v243
    %v248 = vsel %vm123, %v245, 0
    %v251 = vsel %vm123, %v246, 0
    %253 = vmatprep.subr.bf16.mxu0 0
    %254 = vmatpush1.bf16.msra.mxu0 %v211
    %255 = vmatprep.subr.bf16.mxu0 0
    %256 = vmatpush1.bf16.msra.mxu0 %v212
    %257 = vmatprep.subr.bf16.mxu0 0
    %258 = vmatpush1.bf16.msra.mxu0 0
    %259 = vmatprep.subr.bf16.mxu0 0
    %260 = vmatpush1.bf16.msra.mxu0 0
    %261 = vmatprep.subr.bf16.mxu0 0
    %262 = vmatpush1.bf16.msra.mxu0 0
    %263 = vmatprep.subr.bf16.mxu0 0
    %264 = vmatpush1.bf16.msra.mxu0 0
    %265 = vmatprep.subr.bf16.mxu0 0
    %266 = vmatpush1.bf16.msra.mxu0 0
    %267 = vmatprep.subr.bf16.mxu0 0
    %268 = vmatpush1.bf16.msra.mxu0 0
    %269 = vmatprep.subr.bf16.mxu0 0
    %270 = vmatpush1.bf16.msra.mxu0 0
    %271 = vmatprep.subr.bf16.mxu0 0
    %272 = vmatpush1.bf16.msra.mxu0 0
    %273 = vmatprep.subr.bf16.mxu0 0
    %274 = vmatpush1.bf16.msra.mxu0 0
    %275 = vmatprep.subr.bf16.mxu0 0
    %276 = vmatpush1.bf16.msra.mxu0 0
    %277 = vmatprep.subr.bf16.mxu0 0
    %278 = vmatpush1.bf16.msra.mxu0 0
    %279 = vmatprep.subr.bf16.mxu0 0
    %280 = vmatpush1.bf16.msra.mxu0 0
    %281 = vmatprep.subr.bf16.mxu0 0
    %282 = vmatpush1.bf16.msra.mxu0 0
    %283 = vmatprep.subr.bf16.mxu0 0
    %284 = vmatpush1.bf16.msra.mxu0 0
    %285 = vmatprep.mubr.bf16.mxu0 0
    %286 = vmatmul.mubr.bf16.gmra.mrb[0].mxu0 %v248
    %v287 = vpop.f32.mrb[0].mxu0
    %v288 = vadd.f32 %v220, %v287
    %v289 = vpop.f32.mrb[0].mxu0
    %v290 = vpop.f32.mrb[0].mxu0
    %v291 = vadd.f32 %v225, %v290
    %v292 = vpop.f32.mrb[0].mxu0
    %293 = vmatprep.mubr.bf16.mxu0 0
    %294 = vmatmul.mubr.bf16.gmra.mrb[0].mxu0 %v251
    %v295 = vpop.f32.mrb[0].mxu0
    %v296 = vadd.f32 %v230, %v295
    %v297 = vpop.f32.mrb[0].mxu0
    %v298 = vpop.f32.mrb[0].mxu0
    %v299 = vadd.f32 %v235, %v298
    %v300 = vpop.f32.mrb[0].mxu0
    %301 = vdwg.mxu0
    %v302 = vmax.f32 %v288, 0.0
    %v303 = vmax.f32 %v291, 0.0
    %v304 = vmax.f32 %v296, 0.0
    %v305 = vmax.f32 %v299, 0.0
    %v306 = vld [vmem:[%s5] sm:$0xff]
    %v307 = vld [vmem:[%s5 + $0x8] sm:$0xff]
    %v308 = vld [vmem:[%s5 + $0x10] sm:$0xff]
    %v309 = vld [vmem:[%s5 + $0x18] sm:$0xff]
    %311 = vset.pattern.permute.xlu0 0
    %312 = vperm.xlu0 %311, %v306
    %v313 = vpop.permute.xlu0 %312
    %316 = vset.pattern.permute.xlu0 0
    %317 = vperm.xlu0 %316, %v307
    %v318 = vpop.permute.xlu0 %317
    %321 = vset.pattern.permute.xlu0 0
    %322 = vperm.xlu0 %321, %v308
    %v323 = vpop.permute.xlu0 %322
    %326 = vset.pattern.permute.xlu0 0
    %327 = vperm.xlu0 %326, %v309
    %v328 = vpop.permute.xlu0 %327
    %v330 = vmul.f32 %v302, %v313
    %v331 = vmul.f32 %v303, %v318
    %v332 = vmul.f32 %v304, %v323
    %v333 = vmul.f32 %v305, %v328
    %v334 = vadd.f32 %v330, %v331
    %v335 = vadd.f32 %v334, %v332
    %v336 = vadd.f32 %v335, %v333
    %v337 = vrot.slane %v336, 4
    %v338 = vadd.f32 %v336, %v337
    %v339 = vrot.slane %v338, 2
    %v340 = vadd.f32 %v338, %v339
    %v341 = vrot.slane %v340, 1
    %v342 = vadd.f32 %v340, %v341
    %s343 = sld [smem:[#allocation2]]
    %v344 = vstv %s343
    %v345 = vadd.f32 %v342, %v344
    %346 = vst [vmem:[#allocation3] sm:$0x1] %v345
    // Predicated region
    $region30: #{tpu_custom_call.1} parent=1 // pred_check
      _
    $region31: #{tpu_custom_call.1} parent=1 // pred_check_branch
      %348 = sbr.rel (0) target = $region33
    $region32: #{tpu_custom_call.1} parent=1 // pred_region
      %s350 = ssub.s32 16, 16
      %351 = vsyncadd [#allocation4], %s350
      %s353 = sshll.u32 [#allocation3], 4
      %s354 = int_to_ptr.vmem [resolvable:$true] %s353
      %356 = dma.vmem_to_hbm [thread:$0]  %s354, 16, %s7, [#allocation4]
    $region33: #{tpu_custom_call.1} parent=1 // pred_fallthru
      _
    // Predicated region
    $region34: #{tpu_custom_call.1} parent=1 // pred_check
      _
    $region35: #{tpu_custom_call.1} parent=1 // pred_check_branch
      %358 = sbr.rel (0) target = $region37
    $region36: #{tpu_custom_call.1} parent=1 // pred_region
      %359 = dma.done [#allocation4], 16
    $region37: #{tpu_custom_call.1} parent=1 // pred_fallthru
      _
    %360 = vsyncpa [#allocation4], 1

</llo_original>
